<compile_context>
chip_gen: v7x
topology: tpu7x:2x2x1
jax: 0.10.0
libtpu: 0.0.40
codegen_flags: <defaults>
</compile_context>

<pallas_src>
import jax
import jax.numpy as jnp
from jax import lax
from jax.experimental import pallas as pl
from jax.experimental.pallas import tpu as pltpu

F_IN_DEFAULT = 13      # heart-disease tabular features
H1, H2, NCLS = 32, 16, 2


def _round_up(x, m):
    return ((x + m - 1) // m) * m


def _pick_tb(B, tb):
    """Batch-tile width (becomes the lane axis of the in-kernel intermediates)."""
    B128 = _round_up(max(B, 1), 128)
    # Clamp the request to [128, 16384]; floor of 1024 for large batches so we
    # never land in the ~3 KB-DMA / per-step-overhead-dominated regime.
    req = _round_up(min(max(tb, 128), 16384), 128)
    if B128 >= 1024:
        req = max(req, 1024)
    TB = min(req, B128)
    # Keep >= 2 grid steps on large batches so v7x's two TensorCores both work.
    if TB >= B128 and B128 >= 2048:
        TB = _round_up(B128 // 2, 128)
    return TB


def heart_mlp_kernel(x_ref, w1_ref, b1_ref, w2_ref, b2_ref, w3_ref, b3_ref, o_ref):
    """Fused MLP forward on one batch tile.

    x_ref : [TB, F] f32 (natural layout)   w1_ref: [32, F]  bf16   b1_ref: [32, 1] f32
    o_ref : [2, TB] f32 (batch on lanes)   w2_ref: [16, 32] bf16   b2_ref: [16, 1] f32
                                           w3_ref: [2, 16]  bf16   b3_ref: [2, 1]  f32
    """
    x = x_ref[...].astype(jnp.bfloat16)                         # [TB, F]

    # fc1 + relu (dropout is identity at inference).  Contract F on both
    # operands -> [32, TB]: batch lands on the lane axis, intermediates are
    # lane-dense and the operand reorientation happens on the MXU/XLU feed.
    h1 = lax.dot_general(w1_ref[...], x, (((1,), (1,)), ((), ())),
                         preferred_element_type=jnp.float32) + b1_ref[...]
    h1 = jnp.maximum(h1, 0.0).astype(jnp.bfloat16)              # [32, TB]

    # fc2 + relu (dropout is identity at inference)
    h2 = jnp.dot(w2_ref[...], h1, preferred_element_type=jnp.float32) + b2_ref[...]
    h2 = jnp.maximum(h2, 0.0).astype(jnp.bfloat16)              # [16, TB]

    # fc3
    logits = jnp.dot(w3_ref[...], h2, preferred_element_type=jnp.float32) + b3_ref[...]

    # 2-class softmax == sigmoid: p0 = 1 / (1 + exp(l1 - l0)), p1 = 1 - p0.
    # Single exp + approx reciprocal on a [1, TB] row (both on the EUP slot);
    # extreme logit gaps saturate cleanly to 0/1 (no NaN).  Two direct row
    # stores instead of a sublane concat.
    d = logits[1:2, :] - logits[0:1, :]
    p0 = pl.reciprocal(1.0 + jnp.exp(d), approx=True)
    o_ref[0:1, :] = p0
    o_ref[1:2, :] = 1.0 - p0


def heart_disease_forward(x, params, *, tb=8192):
    """x: [B, F] float32; params: dict with w1,b1,w2,b2,w3,b3 (PyTorch [out,in] layout)."""
    B, F = x.shape

    TB = _pick_tb(B, tb)
    Bp = pl.cdiv(B, TB) * TB
    grid = (Bp // TB,)

    # Weights are tiny: cast once to bf16 for the MXU; biases stay f32.
    w1 = params["w1"].astype(jnp.bfloat16)                        # [32, F]
    w2 = params["w2"].astype(jnp.bfloat16)                        # [16, 32]
    w3 = params["w3"].astype(jnp.bfloat16)                        # [2, 16]
    b1, b2, b3 = params["b1"], params["b2"], params["b3"]         # [out, 1] f32

    def resident(arr):  # full array, same block every grid step -> stays in VMEM
        return pl.BlockSpec(arr.shape, lambda i: (0, 0))

    cost = pl.CostEstimate(
        flops=2 * Bp * (F * H1 + H1 * H2 + H2 * NCLS),
        transcendentals=Bp,  # one exp per sample
        bytes_accessed=Bp * F * 4 + Bp * NCLS * 4
        + (H1 * F + H2 * H1 + NCLS * H2) * 2 + (H1 + H2 + NCLS) * 4,
    )

    out_t = pl.pallas_call(
        heart_mlp_kernel,
        out_shape=jax.ShapeDtypeStruct((NCLS, Bp), jnp.float32),
        grid=grid,
        in_specs=[
            # x streamed in its natural [B, F] f32 layout, tiled over the batch.
            # Last tile may be clipped (B need not divide TB); stale rows only
            # ever touch padded output columns, which are sliced off below.
            pl.BlockSpec((TB, F), lambda i: (i, 0)),
            resident(w1), resident(b1),
            resident(w2), resident(b2),
            resident(w3), resident(b3),
        ],
        out_specs=pl.BlockSpec((NCLS, TB), lambda i: (0, i)),     # lane-dense stores
        compiler_params=pltpu.CompilerParams(
            dimension_semantics=("parallel",),
            vmem_limit_bytes=32 * 1024 * 1024,
        ),
        cost_estimate=cost,
    )(x, w1, b1, w2, b2, w3, b3)

    # Output traffic is ~8 B/sample; the tiny transpose back to [B, 2] stays in
    # the wrapper (review: low priority either way).
    return jnp.transpose(out_t)[:B]                               # [B, 2]


def init_params(key, input_size):
    """Deterministic init mirroring nn.Linear ([out, in] weights, [out, 1] biases)."""
    k1, k2, k3, k4, k5, k6 = jax.random.split(key, 6)

    def lin_init(kw, kb, fan_in, fan_out):
        bound = 1.0 / jnp.sqrt(jnp.float32(fan_in))
        w = jax.random.uniform(kw, (fan_out, fan_in), jnp.float32, -bound, bound)
        b = jax.random.uniform(kb, (fan_out, 1), jnp.float32, -bound, bound)
        return w, b

    w1, b1 = lin_init(k1, k2, input_size, H1)
    w2, b2 = lin_init(k3, k4, H1, H2)
    w3, b3 = lin_init(k5, k6, H2, NCLS)
    return {"w1": w1, "b1": b1, "w2": w2, "b2": b2, "w3": w3, "b3": b3}


def reference_forward(x, params):
    """Pure-JAX reference with the same bf16-operand / f32-accumulate precision."""
    w1 = params["w1"].astype(jnp.bfloat16)
    w2 = params["w2"].astype(jnp.bfloat16)
    w3 = params["w3"].astype(jnp.bfloat16)
    xb = x.astype(jnp.bfloat16)

    h1 = jnp.dot(xb, w1.T, preferred_element_type=jnp.float32) + params["b1"].T
    h1 = jnp.maximum(h1, 0.0).astype(jnp.bfloat16)
    h2 = jnp.dot(h1, w2.T, preferred_element_type=jnp.float32) + params["b2"].T
    h2 = jnp.maximum(h2, 0.0).astype(jnp.bfloat16)
    logits = jnp.dot(h2, w3.T, preferred_element_type=jnp.float32) + params["b3"].T
    return jax.nn.softmax(logits, axis=1)


if __name__ == "__main__":
    # Heart-disease tabular data: 13 features; small batch of 8.
    B, F = 8, F_IN_DEFAULT
    key = jax.random.PRNGKey(0)
    kx, kp = jax.random.split(key)

    x = jax.random.normal(kx, (B, F), dtype=jnp.float32)
    params = init_params(kp, F)

    out = jax.block_until_ready(heart_disease_forward(x, params))
    ref = reference_forward(x, params)

    assert out.shape == (B, NCLS)
    assert jnp.allclose(out, ref, atol=3e-3), "mismatch vs reference (small batch)"
    assert jnp.allclose(jnp.sum(out, axis=1), jnp.ones((B,)), atol=1e-5)

    # Second check: batch that is not a tile multiple -> multi-step grid with a
    # clipped edge tile; exercises weight residency across grid iterations.
    B2 = 300
    x2 = jax.random.normal(jax.random.PRNGKey(1), (B2, F), dtype=jnp.float32)
    out2 = jax.block_until_ready(heart_disease_forward(x2, params, tb=128))
    ref2 = reference_forward(x2, params)
    assert out2.shape == (B2, NCLS)
    assert jnp.allclose(out2, ref2, atol=3e-3), "mismatch vs reference (multi-tile)"
    assert jnp.allclose(jnp.sum(out2, axis=1), jnp.ones((B2,)), atol=1e-5)

    print("KERNEL_OK")
</pallas_src>

<mosaic_0001>
module attributes {stable_mosaic.version = 11 : i64} {
  func.func @heart_mlp_kernel(%arg0: i32, %arg1: memref<128x13xf32, #tpu.memory_space<vmem>>, %arg2: memref<32x13xbf16, #tpu.memory_space<vmem>>, %arg3: memref<32x1xf32, #tpu.memory_space<vmem>>, %arg4: memref<16x32xbf16, #tpu.memory_space<vmem>>, %arg5: memref<16x1xf32, #tpu.memory_space<vmem>>, %arg6: memref<2x16xbf16, #tpu.memory_space<vmem>>, %arg7: memref<2x1xf32, #tpu.memory_space<vmem>>, %arg8: memref<2x128xf32, #tpu.memory_space<vmem>>) attributes {dimension_semantics = [#tpu.dimension_semantics<parallel>], iteration_bounds = array<i64: 1>, scalar_prefetch = 0 : i64, scratch_operands = 0 : i64, tpu.core_type = #tpu.core_type<tc>, window_params = [{transform_indices = @transform_0, window_bounds = array<i64: 128, 13>}, {pipeline_mode = #tpu.pipeline_mode<synchronous>, transform_indices = @transform_1, window_bounds = array<i64: 32, 13>}, {pipeline_mode = #tpu.pipeline_mode<synchronous>, transform_indices = @transform_2, window_bounds = array<i64: 32, 1>}, {pipeline_mode = #tpu.pipeline_mode<synchronous>, transform_indices = @transform_3, window_bounds = array<i64: 16, 32>}, {pipeline_mode = #tpu.pipeline_mode<synchronous>, transform_indices = @transform_4, window_bounds = array<i64: 16, 1>}, {pipeline_mode = #tpu.pipeline_mode<synchronous>, transform_indices = @transform_5, window_bounds = array<i64: 2, 16>}, {pipeline_mode = #tpu.pipeline_mode<synchronous>, transform_indices = @transform_6, window_bounds = array<i64: 2, 1>}, {transform_indices = @transform_7, window_bounds = array<i64: 2, 128>}]} {
    %c0 = arith.constant 0 : index
    %c0_0 = arith.constant 0 : index
    %0 = vector.load %arg1[%c0, %c0_0] : memref<128x13xf32, #tpu.memory_space<vmem>>, vector<128x13xf32>
    %1 = arith.truncf %0 : vector<128x13xf32> to vector<128x13xbf16>
    %c0_1 = arith.constant 0 : index
    %c0_2 = arith.constant 0 : index
    %2 = vector.load %arg2[%c0_1, %c0_2] : memref<32x13xbf16, #tpu.memory_space<vmem>>, vector<32x13xbf16>
    %cst = arith.constant dense<0.000000e+00> : vector<32x128xf32>
    %3 = tpu.matmul %2, %1, %cst {dimension_numbers = #tpu.dot_dimension_numbers<[1], [1], [0], [0], [0, 0, 1, 0], [], []>} : vector<32x13xbf16>, vector<128x13xbf16>, vector<32x128xf32> -> vector<32x128xf32>
    %c0_3 = arith.constant 0 : index
    %c0_4 = arith.constant 0 : index
    %4 = vector.load %arg3[%c0_3, %c0_4] : memref<32x1xf32, #tpu.memory_space<vmem>>, vector<32x1xf32>
    %5 = vector.broadcast %4 : vector<32x1xf32> to vector<32x128xf32>
    %6 = arith.addf %3, %5 : vector<32x128xf32>
    %cst_5 = arith.constant 0.000000e+00 : f32
    %7 = vector.broadcast %cst_5 : f32 to vector<32x128xf32>
    %8 = arith.maximumf %6, %7 : vector<32x128xf32>
    %9 = arith.truncf %8 : vector<32x128xf32> to vector<32x128xbf16>
    %c0_6 = arith.constant 0 : index
    %c0_7 = arith.constant 0 : index
    %10 = vector.load %arg4[%c0_6, %c0_7] : memref<16x32xbf16, #tpu.memory_space<vmem>>, vector<16x32xbf16>
    %cst_8 = arith.constant dense<0.000000e+00> : vector<16x128xf32>
    %11 = tpu.matmul %10, %9, %cst_8 {dimension_numbers = #tpu.dot_dimension_numbers<[1], [0], [0], [1], [0, 0, 1, 1], [], []>} : vector<16x32xbf16>, vector<32x128xbf16>, vector<16x128xf32> -> vector<16x128xf32>
    %c0_9 = arith.constant 0 : index
    %c0_10 = arith.constant 0 : index
    %12 = vector.load %arg5[%c0_9, %c0_10] : memref<16x1xf32, #tpu.memory_space<vmem>>, vector<16x1xf32>
    %13 = vector.broadcast %12 : vector<16x1xf32> to vector<16x128xf32>
    %14 = arith.addf %11, %13 : vector<16x128xf32>
    %cst_11 = arith.constant 0.000000e+00 : f32
    %15 = vector.broadcast %cst_11 : f32 to vector<16x128xf32>
    %16 = arith.maximumf %14, %15 : vector<16x128xf32>
    %17 = arith.truncf %16 : vector<16x128xf32> to vector<16x128xbf16>
    %c0_12 = arith.constant 0 : index
    %c0_13 = arith.constant 0 : index
    %18 = vector.load %arg6[%c0_12, %c0_13] : memref<2x16xbf16, #tpu.memory_space<vmem>>, vector<2x16xbf16>
    %cst_14 = arith.constant dense<0.000000e+00> : vector<2x128xf32>
    %19 = tpu.matmul %18, %17, %cst_14 {dimension_numbers = #tpu.dot_dimension_numbers<[1], [0], [0], [1], [0, 0, 1, 1], [], []>} : vector<2x16xbf16>, vector<16x128xbf16>, vector<2x128xf32> -> vector<2x128xf32>
    %c0_15 = arith.constant 0 : index
    %c0_16 = arith.constant 0 : index
    %20 = vector.load %arg7[%c0_15, %c0_16] : memref<2x1xf32, #tpu.memory_space<vmem>>, vector<2x1xf32>
    %21 = vector.broadcast %20 : vector<2x1xf32> to vector<2x128xf32>
    %22 = arith.addf %19, %21 : vector<2x128xf32>
    %23 = vector.extract_strided_slice %22 {offsets = [1, 0], sizes = [1, 128], strides = [1, 1]} : vector<2x128xf32> to vector<1x128xf32>
    %24 = vector.extract_strided_slice %22 {offsets = [0, 0], sizes = [1, 128], strides = [1, 1]} : vector<2x128xf32> to vector<1x128xf32>
    %25 = arith.subf %23, %24 : vector<1x128xf32>
    %26 = math.exp %25 : vector<1x128xf32>
    %cst_17 = arith.constant 1.000000e+00 : f32
    %27 = vector.broadcast %cst_17 : f32 to vector<1x128xf32>
    %28 = arith.addf %27, %26 : vector<1x128xf32>
    %29 = tpu.reciprocal %28 {approx = true} : vector<1x128xf32> -> vector<1x128xf32>
    %c0_18 = arith.constant 0 : index
    %c0_19 = arith.constant 0 : index
    %30 = vector.load %arg8[%c0_18, %c0_19] : memref<2x128xf32, #tpu.memory_space<vmem>>, vector<1x128xf32>
    tpu.vector_store %arg8[%c0_18, %c0_19], %29 {strides = array<i32>} : memref<2x128xf32, #tpu.memory_space<vmem>>, vector<1x128xf32>,
    %cst_20 = arith.constant 1.000000e+00 : f32
    %31 = vector.broadcast %cst_20 : f32 to vector<1x128xf32>
    %32 = arith.subf %31, %29 : vector<1x128xf32>
    %c1 = arith.constant 1 : index
    %c0_21 = arith.constant 0 : index
    %33 = vector.load %arg8[%c1, %c0_21] : memref<2x128xf32, #tpu.memory_space<vmem>>, vector<1x128xf32>
    tpu.vector_store %arg8[%c1, %c0_21], %32 {strides = array<i32>} : memref<2x128xf32, #tpu.memory_space<vmem>>, vector<1x128xf32>,
    return
  }
  func.func @transform_0(%arg0: i32) -> (i32, i32) {
    %c0_i32 = arith.constant 0 : i32
    %c0_i32_0 = arith.constant 0 : i32
    return %arg0, %c0_i32 : i32, i32
  }
  func.func @transform_1(%arg0: i32) -> (i32, i32) {
    %c0_i32 = arith.constant 0 : i32
    %c0_i32_0 = arith.constant 0 : i32
    %c0_i32_1 = arith.constant 0 : i32
    return %c0_i32, %c0_i32_0 : i32, i32
  }
  func.func @transform_2(%arg0: i32) -> (i32, i32) {
    %c0_i32 = arith.constant 0 : i32
    %c0_i32_0 = arith.constant 0 : i32
    %c0_i32_1 = arith.constant 0 : i32
    return %c0_i32, %c0_i32_0 : i32, i32
  }
  func.func @transform_3(%arg0: i32) -> (i32, i32) {
    %c0_i32 = arith.constant 0 : i32
    %c0_i32_0 = arith.constant 0 : i32
    %c0_i32_1 = arith.constant 0 : i32
    return %c0_i32, %c0_i32_0 : i32, i32
  }
  func.func @transform_4(%arg0: i32) -> (i32, i32) {
    %c0_i32 = arith.constant 0 : i32
    %c0_i32_0 = arith.constant 0 : i32
    %c0_i32_1 = arith.constant 0 : i32
    return %c0_i32, %c0_i32_0 : i32, i32
  }
  func.func @transform_5(%arg0: i32) -> (i32, i32) {
    %c0_i32 = arith.constant 0 : i32
    %c0_i32_0 = arith.constant 0 : i32
    %c0_i32_1 = arith.constant 0 : i32
    return %c0_i32, %c0_i32_0 : i32, i32
  }
  func.func @transform_6(%arg0: i32) -> (i32, i32) {
    %c0_i32 = arith.constant 0 : i32
    %c0_i32_0 = arith.constant 0 : i32
    %c0_i32_1 = arith.constant 0 : i32
    return %c0_i32, %c0_i32_0 : i32, i32
  }
  func.func @transform_7(%arg0: i32) -> (i32, i32) {
    %c0_i32 = arith.constant 0 : i32
    %c0_i32_0 = arith.constant 0 : i32
    return %c0_i32, %arg0 : i32, i32
  }
}

</mosaic_0001>

<llo_original>
// kernel: tpu_custom_call.1
$region0: #{tpu_custom_call.1}
  #allocation0 [shape = 'u32[]', space=smem, size = 0x4, offset = 0x4, fixed_abs, tag = 'smem constant byte address 0x4 - core index']
  #allocation1 [shape = 'u32[144,128]{1,0:T(1,128)}', space=vmem, size = 0x12000, scoped, tag = 'internal scratch']
  %s0 = inlined_call_operand.vmem [shape: f32[8,13], index: 0, kind: input, shape index: {}]
  %s1 = inlined_call_operand.vmem [shape: bf16[32,13], index: 1, kind: input, shape index: {}]
  %s2 = inlined_call_operand.vmem [shape: f32[32,1], index: 2, kind: input, shape index: {}]
  %s3 = inlined_call_operand.vmem [shape: bf16[16,32], index: 3, kind: input, shape index: {}]
  %s4 = inlined_call_operand.vmem [shape: f32[16,1], index: 4, kind: input, shape index: {}]
  %s5 = inlined_call_operand.vmem [shape: bf16[2,16], index: 5, kind: input, shape index: {}]
  %s6 = inlined_call_operand.vmem [shape: f32[2,1], index: 6, kind: input, shape index: {}]
  %s7 = inlined_call_operand.hbm [shape: f32[2,128], index: 7, kind: output, shape index: {}]
  %s8 = sld [smem:[#allocation0]]
  $region38: #{tpu_custom_call.1} parent=0
    _
  %s10 = ssub.s32 1, %s8
  %s11 = scalar_select 0, %s10, %s8
  $region1: #{tpu_custom_call.1} parent=0
    #allocation2 [shape = 'u8[1024]{0}', space=vmem, size = 0x400, scoped, tag = 'output window, operand 0, single buffered']
    #allocation3 [shape = 's32[1]{0}', space=sflag, size = 0x4, scoped, tag = 'scoped memory for tpu_custom_call.1']
    %12 = vsyncpa [#allocation3], 0
    // Predicated region
    $region2: #{tpu_custom_call.1} parent=1 // pred_check
      _
    $region3: #{tpu_custom_call.1} parent=1 // pred_check_branch
      %14 = sbr.rel (0) target = $region5
    $region4: #{tpu_custom_call.1} parent=1 // pred_region
      _
    $region5: #{tpu_custom_call.1} parent=1 // pred_fallthru
      _
    // Predicated region
    $region6: #{tpu_custom_call.1} parent=1 // pred_check
      _
    $region7: #{tpu_custom_call.1} parent=1 // pred_check_branch
      %16 = sbr.rel (0) target = $region9
    $region8: #{tpu_custom_call.1} parent=1 // pred_region
      _
    $region9: #{tpu_custom_call.1} parent=1 // pred_fallthru
      _
    // Predicated region
    $region10: #{tpu_custom_call.1} parent=1 // pred_check
      _
    $region11: #{tpu_custom_call.1} parent=1 // pred_check_branch
      %18 = sbr.rel (0) target = $region13
    $region12: #{tpu_custom_call.1} parent=1 // pred_region
      _
    $region13: #{tpu_custom_call.1} parent=1 // pred_fallthru
      _
    // Predicated region
    $region14: #{tpu_custom_call.1} parent=1 // pred_check
      _
    $region15: #{tpu_custom_call.1} parent=1 // pred_check_branch
      %20 = sbr.rel (0) target = $region17
    $region16: #{tpu_custom_call.1} parent=1 // pred_region
      _
    $region17: #{tpu_custom_call.1} parent=1 // pred_fallthru
      _
    // Predicated region
    $region18: #{tpu_custom_call.1} parent=1 // pred_check
      _
    $region19: #{tpu_custom_call.1} parent=1 // pred_check_branch
      %22 = sbr.rel (0) target = $region21
    $region20: #{tpu_custom_call.1} parent=1 // pred_region
      _
    $region21: #{tpu_custom_call.1} parent=1 // pred_fallthru
      _
    // Predicated region
    $region22: #{tpu_custom_call.1} parent=1 // pred_check
      _
    $region23: #{tpu_custom_call.1} parent=1 // pred_check_branch
      %24 = sbr.rel (0) target = $region25
    $region24: #{tpu_custom_call.1} parent=1 // pred_region
      _
    $region25: #{tpu_custom_call.1} parent=1 // pred_fallthru
      _
    // Predicated region
    $region26: #{tpu_custom_call.1} parent=1 // pred_check
      _
    $region27: #{tpu_custom_call.1} parent=1 // pred_check_branch
      %26 = sbr.rel (0) target = $region29
    $region28: #{tpu_custom_call.1} parent=1 // pred_region
      _
    $region29: #{tpu_custom_call.1} parent=1 // pred_fallthru
      _
    %v28 = vld [vmem:[%s0] sm:$0xff]
    %v29 = vld [vmem:[%s0 + $0x8] sm:$0xff]
    %v30 = vld [vmem:[%s0 + $0x10] sm:$0xff]
    %v31 = vld [vmem:[%s0 + $0x18] sm:$0xff]
    %v32 = vld [vmem:[%s0 + $0x20] sm:$0xff]
    %v33 = vld [vmem:[%s0 + $0x28] sm:$0xff]
    %v34 = vld [vmem:[%s0 + $0x30] sm:$0xff]
    %v35 = vld [vmem:[%s0 + $0x38] sm:$0xff]
    %v36 = vld [vmem:[%s0 + $0x40] sm:$0xff]
    %v37 = vld [vmem:[%s0 + $0x48] sm:$0xff]
    %v38 = vld [vmem:[%s0 + $0x50] sm:$0xff]
    %v39 = vld [vmem:[%s0 + $0x58] sm:$0xff]
    %v40 = vld [vmem:[%s0 + $0x60] sm:$0xff]
    %v41 = vld [vmem:[%s0 + $0x68] sm:$0xff]
    %v42 = vld [vmem:[%s0 + $0x70] sm:$0xff]
    %v43 = vld [vmem:[%s0 + $0x78] sm:$0xff]
    %v44 = vpack.c.bf16 %v29, %v28
    %v45 = vpack.c.bf16 %v31, %v30
    %v46 = vpack.c.bf16 %v33, %v32
    %v47 = vpack.c.bf16 %v35, %v34
    %v48 = vpack.c.bf16 %v37, %v36
    %v49 = vpack.c.bf16 %v39, %v38
    %v50 = vpack.c.bf16 %v41, %v40
    %v51 = vpack.c.bf16 %v43, %v42
    %v52 = vld [vmem:[%s1] sm:$0xf]
    %v53 = vld [vmem:[%s1 + $0x4] sm:$0xf]
    %v54 = vld [vmem:[%s1 + $0x8] sm:$0xf]
    %v55 = vld [vmem:[%s1 + $0xc] sm:$0xf]
    %v56 = vld [vmem:[%s2] sm:$0xff]
    %v57 = vld [vmem:[%s2 + $0x8] sm:$0xff]
    %v58 = vld [vmem:[%s2 + $0x10] sm:$0xff]
    %v59 = vld [vmem:[%s2 + $0x18] sm:$0xff]
    %61 = vset.pattern.permute.xlu0 0
    %62 = vperm.xlu0 %61, %v56
    %v63 = vpop.permute.xlu0 %62
    %66 = vset.pattern.permute.xlu0 0
    %67 = vperm.xlu0 %66, %v57
    %v68 = vpop.permute.xlu0 %67
    %71 = vset.pattern.permute.xlu0 0
    %72 = vperm.xlu0 %71, %v58
    %v73 = vpop.permute.xlu0 %72
    %76 = vset.pattern.permute.xlu0 0
    %77 = vperm.xlu0 %76, %v59
    %v78 = vpop.permute.xlu0 %77
    %v84 = vunpack.c.l.b16 %v52
    %v85 = vunpack.c.l.b16 %v53
    %v86 = vunpack.c.l.b16 %v54
    %v87 = vunpack.c.l.b16 %v55
    %v88 = vpack.c.b16 %v85, %v84
    %v89 = vpack.c.b16 %v87, %v86
    %vm90 = vcmask 105472
    %v92 = vsel %vm90, %v88, 0
    %v95 = vsel %vm90, %v89, 0
    %v98 = vsel %vm90, %v44, 0
    %v101 = vsel %vm90, %v45, 0
    %v104 = vsel %vm90, %v46, 0
    %v107 = vsel %vm90, %v47, 0
    %v110 = vsel %vm90, %v48, 0
    %v113 = vsel %vm90, %v49, 0
    %v116 = vsel %vm90, %v50, 0
    %v119 = vsel %vm90, %v51, 0
    %121 = vmatprep.subr.bf16.mxu0 0
    %122 = vmatpush1.bf16.xpose.msra.mxu0 %v98
    %123 = vmatprep.subr.bf16.mxu0 0
    %124 = vmatpush1.bf16.xpose.msra.mxu0 %v101
    %125 = vmatprep.subr.bf16.mxu0 0
    %126 = vmatpush1.bf16.xpose.msra.mxu0 %v104
    %127 = vmatprep.subr.bf16.mxu0 0
    %128 = vmatpush1.bf16.xpose.msra.mxu0 %v107
    %129 = vmatprep.subr.bf16.mxu0 0
    %130 = vmatpush1.bf16.xpose.msra.mxu0 %v110
    %131 = vmatprep.subr.bf16.mxu0 0
    %132 = vmatpush1.bf16.xpose.msra.mxu0 %v113
    %133 = vmatprep.subr.bf16.mxu0 0
    %134 = vmatpush1.bf16.xpose.msra.mxu0 %v116
    %135 = vmatprep.subr.bf16.mxu0 0
    %136 = vmatpush1.bf16.xpose.msra.mxu0 %v119
    %137 = vmatprep.subr.bf16.mxu0 0
    %138 = vmatpush1.bf16.xpose.msra.mxu0 0
    %139 = vmatprep.subr.bf16.mxu0 0
    %140 = vmatpush1.bf16.xpose.msra.mxu0 0
    %141 = vmatprep.subr.bf16.mxu0 0
    %142 = vmatpush1.bf16.xpose.msra.mxu0 0
    %143 = vmatprep.subr.bf16.mxu0 0
    %144 = vmatpush1.bf16.xpose.msra.mxu0 0
    %145 = vmatprep.subr.bf16.mxu0 0
    %146 = vmatpush1.bf16.xpose.msra.mxu0 0
    %147 = vmatprep.subr.bf16.mxu0 0
    %148 = vmatpush1.bf16.xpose.msra.mxu0 0
    %149 = vmatprep.subr.bf16.mxu0 0
    %150 = vmatpush1.bf16.xpose.msra.mxu0 0
    %151 = vmatprep.subr.bf16.mxu0 0
    %152 = vmatpush1.bf16.xpose.msra.mxu0 0
    %153 = vmatprep.mubr.bf16.mxu0 0
    %154 = vmatmul.mubr.bf16.gmra.mrb[0].mxu0 %v92
    %v155 = vpop.f32.mrb[0].mxu0
    %v156 = vadd.f32 %v63, %v155
    %v157 = vpop.f32.mrb[0].mxu0
    %v158 = vpop.f32.mrb[0].mxu0
    %v159 = vadd.f32 %v68, %v158
    %v160 = vpop.f32.mrb[0].mxu0
    %161 = vmatprep.mubr.bf16.mxu0 0
    %162 = vmatmul.mubr.bf16.gmra.mrb[0].mxu0 %v95
    %v163 = vpop.f32.mrb[0].mxu0
    %v164 = vadd.f32 %v73, %v163
    %v165 = vpop.f32.mrb[0].mxu0
    %v166 = vpop.f32.mrb[0].mxu0
    %v167 = vadd.f32 %v78, %v166
    %v168 = vpop.f32.mrb[0].mxu0
    %169 = vdwg.mxu0
    %v170 = vmax.f32 %v156, 0.0
    %v171 = vmax.f32 %v159, 0.0
    %v172 = vmax.f32 %v164, 0.0
    %v173 = vmax.f32 %v167, 0.0
    %v174 = vpack.c.bf16 %v171, %v170
    %v175 = vpack.c.bf16 %v173, %v172
    %v176 = vld [vmem:[%s3] sm:$0xf]
    %v177 = vld [vmem:[%s3 + $0x4] sm:$0xf]
    %v178 = vld [vmem:[%s4] sm:$0xff]
    %v179 = vld [vmem:[%s4 + $0x8] sm:$0xff]
    %181 = vset.pattern.permute.xlu0 0
    %182 = vperm.xlu0 %181, %v178
    %v183 = vpop.permute.xlu0 %182
    %186 = vset.pattern.permute.xlu0 0
    %187 = vperm.xlu0 %186, %v179
    %v188 = vpop.permute.xlu0 %187
    %v192 = vunpack.c.l.b16 %v176
    %v193 = vunpack.c.l.b16 %v177
    %v194 = vpack.c.b16 %v193, %v192
    %vm195 = vcmask 261120
    %v197 = vsel %vm195, %v194, 0
    %199 = vmatprep.subr.bf16.mxu0 0
    %200 = vmatpush1.bf16.msra.mxu0 %v174
    %201 = vmatprep.subr.bf16.mxu0 0
    %202 = vmatpush1.bf16.msra.mxu0 %v175
    %203 = vmatprep.subr.bf16.mxu0 0
    %204 = vmatpush1.bf16.msra.mxu0 0
    %205 = vmatprep.subr.bf16.mxu0 0
    %206 = vmatpush1.bf16.msra.mxu0 0
    %207 = vmatprep.subr.bf16.mxu0 0
    %208 = vmatpush1.bf16.msra.mxu0 0
    %209 = vmatprep.subr.bf16.mxu0 0
    %210 = vmatpush1.bf16.msra.mxu0 0
    %211 = vmatprep.subr.bf16.mxu0 0
    %212 = vmatpush1.bf16.msra.mxu0 0
    %213 = vmatprep.subr.bf16.mxu0 0
    %214 = vmatpush1.bf16.msra.mxu0 0
    %215 = vmatprep.subr.bf16.mxu0 0
    %216 = vmatpush1.bf16.msra.mxu0 0
    %217 = vmatprep.subr.bf16.mxu0 0
    %218 = vmatpush1.bf16.msra.mxu0 0
    %219 = vmatprep.subr.bf16.mxu0 0
    %220 = vmatpush1.bf16.msra.mxu0 0
    %221 = vmatprep.subr.bf16.mxu0 0
    %222 = vmatpush1.bf16.msra.mxu0 0
    %223 = vmatprep.subr.bf16.mxu0 0
    %224 = vmatpush1.bf16.msra.mxu0 0
    %225 = vmatprep.subr.bf16.mxu0 0
    %226 = vmatpush1.bf16.msra.mxu0 0
    %227 = vmatprep.subr.bf16.mxu0 0
    %228 = vmatpush1.bf16.msra.mxu0 0
    %229 = vmatprep.subr.bf16.mxu0 0
    %230 = vmatpush1.bf16.msra.mxu0 0
    %231 = vmatprep.mubr.bf16.mxu0 0
    %232 = vmatmul.mubr.bf16.gmra.mrb[0].mxu0 %v197
    %v233 = vpop.f32.mrb[0].mxu0
    %v234 = vadd.f32 %v183, %v233
    %v235 = vpop.f32.mrb[0].mxu0
    %v236 = vpop.f32.mrb[0].mxu0
    %v237 = vadd.f32 %v188, %v236
    %v238 = vpop.f32.mrb[0].mxu0
    %239 = vdwg.mxu0
    %v240 = vmax.f32 %v234, 0.0
    %v241 = vmax.f32 %v237, 0.0
    %v242 = vpack.c.bf16 %v241, %v240
    %v243 = vld [vmem:[%s5] sm:$0x1]
    %v244 = vld [vmem:[%s6] sm:$0x3]
    %246 = vset.pattern.permute.xlu0 0
    %247 = vperm.xlu0 %246, %v244
    %v248 = vpop.permute.xlu0 %247
    %vm250 = vcmask 130048
    %v252 = vsel %vm250, %v243, 0
    %254 = vmatprep.subr.bf16.mxu0 0
    %255 = vmatpush1.bf16.msra.mxu0 %v242
    %256 = vmatprep.subr.bf16.mxu0 0
    %257 = vmatpush1.bf16.msra.mxu0 0
    %258 = vmatprep.subr.bf16.mxu0 0
    %259 = vmatpush1.bf16.msra.mxu0 0
    %260 = vmatprep.subr.bf16.mxu0 0
    %261 = vmatpush1.bf16.msra.mxu0 0
    %262 = vmatprep.subr.bf16.mxu0 0
    %263 = vmatpush1.bf16.msra.mxu0 0
    %264 = vmatprep.subr.bf16.mxu0 0
    %265 = vmatpush1.bf16.msra.mxu0 0
    %266 = vmatprep.subr.bf16.mxu0 0
    %267 = vmatpush1.bf16.msra.mxu0 0
    %268 = vmatprep.subr.bf16.mxu0 0
    %269 = vmatpush1.bf16.msra.mxu0 0
    %270 = vmatprep.subr.bf16.mxu0 0
    %271 = vmatpush1.bf16.msra.mxu0 0
    %272 = vmatprep.subr.bf16.mxu0 0
    %273 = vmatpush1.bf16.msra.mxu0 0
    %274 = vmatprep.subr.bf16.mxu0 0
    %275 = vmatpush1.bf16.msra.mxu0 0
    %276 = vmatprep.subr.bf16.mxu0 0
    %277 = vmatpush1.bf16.msra.mxu0 0
    %278 = vmatprep.subr.bf16.mxu0 0
    %279 = vmatpush1.bf16.msra.mxu0 0
    %280 = vmatprep.subr.bf16.mxu0 0
    %281 = vmatpush1.bf16.msra.mxu0 0
    %282 = vmatprep.subr.bf16.mxu0 0
    %283 = vmatpush1.bf16.msra.mxu0 0
    %284 = vmatprep.subr.bf16.mxu0 0
    %285 = vmatpush1.bf16.msra.mxu0 0
    %286 = vmatprep.mubr.bf16.mxu0 0
    %287 = vmatmul.mubr.bf16.gmra.mrb[0].mxu0 %v252
    %v288 = vpop.f32.mrb[0].mxu0
    %v289 = vadd.f32 %v248, %v288
    %v290 = vpop.f32.mrb[0].mxu0
    %v291 = vpop.f32.mrb[0].mxu0
    %v292 = vpop.f32.mrb[0].mxu0
    %293 = vdwg.mxu0
    %v295 = vrot.slane %v289, 7
    %v297 = vsub.f32 %v289, %v295
    %v298 = vmul.f32 %v297, 1.442695
    %v299 = vpow.pop %v298
    %v300 = vadd.f32 %v299, 1.0
    %v301 = vrcp.pop %v300
    %302 = vst [vmem:[#allocation2 - $0x1] sm:$0x2] %v301
    %v303 = vsub.f32 1.0, %v301
    %304 = vst [vmem:[#allocation2] sm:$0x2] %v303
    // Predicated region
    $region30: #{tpu_custom_call.1} parent=1 // pred_check
      _
    $region31: #{tpu_custom_call.1} parent=1 // pred_check_branch
      %306 = sbr.rel (0) target = $region33
    $region32: #{tpu_custom_call.1} parent=1 // pred_region
      %s308 = ssub.s32 32, 32
      %309 = vsyncadd [#allocation3], %s308
      %s311 = sshll.u32 [#allocation2], 4
      %s312 = int_to_ptr.vmem [resolvable:$true] %s311
      %314 = dma.vmem_to_hbm [thread:$0]  %s312, 32, %s7, [#allocation3]
    $region33: #{tpu_custom_call.1} parent=1 // pred_fallthru
      _
    // Predicated region
    $region34: #{tpu_custom_call.1} parent=1 // pred_check
      _
    $region35: #{tpu_custom_call.1} parent=1 // pred_check_branch
      %316 = sbr.rel (0) target = $region37
    $region36: #{tpu_custom_call.1} parent=1 // pred_region
      %317 = dma.done [#allocation3], 32
    $region37: #{tpu_custom_call.1} parent=1 // pred_fallthru
      _
    %318 = vsyncpa [#allocation3], 1

</llo_original>
